<compile_context>
chip_gen: v7x
topology: tpu7x:2x2x1
jax: 0.10.0
libtpu: 0.0.40
codegen_flags: <defaults>
</compile_context>

<pallas_src>
import functools

import jax
import jax.numpy as jnp
from jax.experimental import pallas as pl
from jax.experimental.pallas import tpu as pltpu


def _decoder_kernel(n_layers, hidden_dim, max_in,
                    ids_ref, emb_ref, slab_ref, fc_ref, h0_ref, c0_ref,
                    pred_ref, h_out_ref, c_out_ref,
                    h_scr, c_scr):
    H = hidden_dim
    B = ids_ref.shape[1]
    wdt = slab_ref.dtype                      # MXU input dtype (f32 or bf16)
    t = pl.program_id(0)

    # ---- load initial recurrent state into VMEM scratch once -------------------
    @pl.when(t == 0)
    def _():
        h_scr[...] = h0_ref[...]
        c_scr[...] = c0_ref[...]

    # ---- embedding: one-hot matmul lookup (MXU) ---------------------------------
    ids = ids_ref[0]                                              # [B, 1] int32
    onehot = (ids == jax.lax.broadcasted_iota(jnp.int32, (B, 3), 1)).astype(wdt)
    x = jnp.dot(onehot, emb_ref[...], preferred_element_type=jnp.float32)   # [B, E] f32

    # hoisted constants (JAX does not CSE broadcasts inside the layer loop)
    ones_col = jnp.ones((B, 1), jnp.float32)
    sig_mask = jax.lax.broadcasted_iota(jnp.int32, (B, 4 * H), 1) < 3 * H

    # ---- LSTM stack (seq_len == 1 per grid step) --------------------------------
    for l in range(n_layers):
        h_prev = h_scr[l]                                         # [B, H] f32
        c_prev = c_scr[l]                                         # [B, H] f32

        xin = x
        if xin.shape[1] < max_in:                                 # static pad (layer 0 if E < H)
            xin = jnp.concatenate(
                [xin, jnp.zeros((B, max_in - xin.shape[1]), xin.dtype)], axis=1)

        # bias folded into the matmul via the ones column; slab row layout:
        #   rows [0:max_in] = W_ih^T, rows [max_in:max_in+H] = W_hh^T, last row = b_ih+b_hh
        # gate column order is [i, f, o, g].
        cat = jnp.concatenate([xin, h_prev, ones_col], axis=1).astype(wdt)  # [B, max_in+H+1]
        gates = jnp.dot(cat, slab_ref[l], preferred_element_type=jnp.float32)  # [B, 4H] f32

        # full-vreg activations, blended by a lane mask at 3H (EUP is otherwise idle)
        act = jnp.where(sig_mask, jax.nn.sigmoid(gates), jnp.tanh(gates))
        i_g = act[:, 0:H]
        f_g = act[:, H:2 * H]
        o_g = act[:, 2 * H:3 * H]
        g_g = act[:, 3 * H:4 * H]

        c_new = f_g * c_prev + i_g * g_g
        h_new = o_g * jnp.tanh(c_new)

        h_scr[l] = h_new
        c_scr[l] = c_new
        x = h_new                                 # next layer input (eval: dropout = identity)

    # ---- output projection (bias folded in as the last weight row, lane-dense) --
    xb = jnp.concatenate([x, ones_col], axis=1).astype(wdt)       # [B, H+1]
    pred_ref[0] = jnp.dot(xb, fc_ref[...], preferred_element_type=jnp.float32)

    # ---- write recurrent state back to HBM only once, at the final step ---------
    @pl.when(t == pl.num_programs(0) - 1)
    def _():
        h_out_ref[...] = h_scr[...]
        c_out_ref[...] = c_scr[...]


def prepare_decoder_weights(params, weight_dtype=jnp.bfloat16):
    """One-time weight re-layout, hoisted out of the decode path (bf16 by default)."""
    H = params["w_hh"][0].shape[1]
    E = params["emb"].shape[1]
    L = len(params["w_ih"])
    O = params["fc_w"].shape[0]
    max_in = max(E, H)
    out_pad = ((O + 127) // 128) * 128

    def reorder(w):     # PyTorch gate blocks [i, f, g, o] -> packed order [i, f, o, g]
        return jnp.concatenate(
            [w[0:H], w[H:2 * H], w[3 * H:4 * H], w[2 * H:3 * H]], axis=0)

    slab = jnp.zeros((L, max_in + H + 1, 4 * H), jnp.float32)
    for l in range(L):
        w_ih_t = reorder(params["w_ih"][l]).T                       # [in_l, 4H]
        w_hh_t = reorder(params["w_hh"][l]).T                       # [H,    4H]
        b = reorder(params["b_ih"][l] + params["b_hh"][l])          # [4H]
        in_l = w_ih_t.shape[0]
        slab = slab.at[l, 0:in_l, :].set(w_ih_t)
        slab = slab.at[l, max_in:max_in + H, :].set(w_hh_t)
        slab = slab.at[l, max_in + H, :].set(b)

    fc = jnp.zeros((H + 1, out_pad), jnp.float32)
    fc = fc.at[0:H, 0:O].set(params["fc_w"].T)
    fc = fc.at[H, 0:O].set(params["fc_b"])

    return {
        "emb": params["emb"].astype(weight_dtype),
        "lstm_slab": slab.astype(weight_dtype),
        "fc_slab": fc.astype(weight_dtype),
        "dims": (L, H, E, max_in, out_pad, O),
    }


def decoder_decode(input_ids_seq, hidden, cell, prepared):
    """Fused multi-step decode (teacher-forced token sequence).

    input_ids_seq: int32 [T, B]; hidden, cell: f32 [L, B, H].
    Returns (predictions [T, B, O], hidden [L, B, H], cell [L, B, H]).
    """
    L, H, E, max_in, out_pad, O = prepared["dims"]
    T, B = input_ids_seq.shape
    ids3d = input_ids_seq.astype(jnp.int32).reshape(T, B, 1)

    preds_pad, h_out, c_out = pl.pallas_call(
        functools.partial(_decoder_kernel, L, H, max_in),
        grid=(T,),
        out_shape=(
            jax.ShapeDtypeStruct((T, B, out_pad), jnp.float32),
            jax.ShapeDtypeStruct((L, B, H), jnp.float32),
            jax.ShapeDtypeStruct((L, B, H), jnp.float32),
        ),
        in_specs=[
            pl.BlockSpec((1, B, 1), lambda t: (t, 0, 0)),                    # ids (per step)
            pl.BlockSpec((3, E), lambda t: (0, 0)),                          # emb (resident)
            pl.BlockSpec((L, max_in + H + 1, 4 * H), lambda t: (0, 0, 0)),   # lstm slab (resident)
            pl.BlockSpec((H + 1, out_pad), lambda t: (0, 0)),                # fc slab (resident)
            pl.BlockSpec((L, B, H), lambda t: (0, 0, 0)),                    # h0 (resident)
            pl.BlockSpec((L, B, H), lambda t: (0, 0, 0)),                    # c0 (resident)
        ],
        out_specs=(
            pl.BlockSpec((1, B, out_pad), lambda t: (t, 0, 0)),              # per-step prediction
            pl.BlockSpec((L, B, H), lambda t: (0, 0, 0)),                    # final hidden
            pl.BlockSpec((L, B, H), lambda t: (0, 0, 0)),                    # final cell
        ),
        scratch_shapes=[pltpu.VMEM((L, B, H), jnp.float32),                  # h state carry
                        pltpu.VMEM((L, B, H), jnp.float32)],                 # c state carry
        compiler_params=pltpu.CompilerParams(
            dimension_semantics=("arbitrary",),          # sequential h/c dependence across steps
            vmem_limit_bytes=32 * 1024 * 1024),
    )(ids3d, prepared["emb"], prepared["lstm_slab"], prepared["fc_slab"], hidden, cell)

    return preds_pad[:, :, :O], h_out, c_out


def decoder_forward(input_ids, hidden, cell, prepared):
    """Single decoding step, matching the PyTorch Decoder.forward semantics."""
    preds, h_out, c_out = decoder_decode(input_ids.reshape(1, -1), hidden, cell, prepared)
    return preds[0], h_out, c_out


def make_params(key, output_dim, embedding_dim, hidden_dim, n_layers):
    """Deterministic synthetic parameters (PyTorch-style uniform(+-1/sqrt(H)))."""
    keys = jax.random.split(key, 4 + 4 * n_layers)
    k_iter = iter(keys)
    bound = 1.0 / jnp.sqrt(hidden_dim)

    w_ih, w_hh, b_ih, b_hh = [], [], [], []
    for l in range(n_layers):
        in_l = embedding_dim if l == 0 else hidden_dim
        w_ih.append(jax.random.uniform(next(k_iter), (4 * hidden_dim, in_l),
                                       minval=-bound, maxval=bound, dtype=jnp.float32))
        w_hh.append(jax.random.uniform(next(k_iter), (4 * hidden_dim, hidden_dim),
                                       minval=-bound, maxval=bound, dtype=jnp.float32))
        b_ih.append(jax.random.uniform(next(k_iter), (4 * hidden_dim,),
                                       minval=-bound, maxval=bound, dtype=jnp.float32))
        b_hh.append(jax.random.uniform(next(k_iter), (4 * hidden_dim,),
                                       minval=-bound, maxval=bound, dtype=jnp.float32))

    params = {
        "emb": jax.random.normal(next(k_iter), (3, embedding_dim), jnp.float32),
        "w_ih": w_ih, "w_hh": w_hh, "b_ih": b_ih, "b_hh": b_hh,
        "fc_w": jax.random.uniform(next(k_iter), (output_dim, hidden_dim),
                                   minval=-bound, maxval=bound, dtype=jnp.float32),
        "fc_b": jax.random.uniform(next(k_iter), (output_dim,),
                                   minval=-bound, maxval=bound, dtype=jnp.float32),
    }
    return params


def decoder_forward_ref(input_ids, hidden, cell, params):
    """Pure-JAX single-step reference (mirrors PyTorch nn.LSTM math)."""
    L, _, H = hidden.shape
    x = jnp.take(params["emb"], input_ids, axis=0)
    h_out, c_out = [], []
    for l in range(L):
        gates = (x @ params["w_ih"][l].T + hidden[l] @ params["w_hh"][l].T
                 + params["b_ih"][l] + params["b_hh"][l])
        i, f, g, o = (jax.nn.sigmoid(gates[:, :H]),
                      jax.nn.sigmoid(gates[:, H:2 * H]),
                      jnp.tanh(gates[:, 2 * H:3 * H]),
                      jax.nn.sigmoid(gates[:, 3 * H:]))
        c_new = f * cell[l] + i * g
        h_new = o * jnp.tanh(c_new)
        h_out.append(h_new)
        c_out.append(c_new)
        x = h_new
    pred = x @ params["fc_w"].T + params["fc_b"]
    return pred, jnp.stack(h_out), jnp.stack(c_out)


def decoder_decode_ref(input_ids_seq, hidden, cell, params):
    preds = []
    h, c = hidden, cell
    for t in range(input_ids_seq.shape[0]):
        p, h, c = decoder_forward_ref(input_ids_seq[t], h, c, params)
        preds.append(p)
    return jnp.stack(preds), h, c


if __name__ == "__main__":
    OUTPUT_DIM = 3      # matches the 3-class emotion setup (embedding table has 3 rows)
    EMBEDDING_DIM = 32
    HIDDEN_DIM = 32
    N_LAYERS = 2
    BATCH = 8           # fill sublanes (review: B >= 8)
    STEPS = 6           # fused autoregressive decode length

    key = jax.random.PRNGKey(0)
    k_p, k_in, k_h, k_c = jax.random.split(key, 4)

    params = make_params(k_p, OUTPUT_DIM, EMBEDDING_DIM, HIDDEN_DIM, N_LAYERS)
    ids_seq = jax.random.randint(k_in, (STEPS, BATCH), 0, 3, dtype=jnp.int32)
    hidden = jax.random.normal(k_h, (N_LAYERS, BATCH, HIDDEN_DIM), jnp.float32)
    cell = jax.random.normal(k_c, (N_LAYERS, BATCH, HIDDEN_DIM), jnp.float32)

    # Pure-JAX references (mirror the PyTorch module math).
    preds_r, h_r, c_r = decoder_decode_ref(ids_seq, hidden, cell, params)
    pred1_r, h1_r, c1_r = decoder_forward_ref(ids_seq[0], hidden, cell, params)

    # fp32 weight path: fused multi-step decode (weights VMEM-resident across all steps).
    prep_f32 = prepare_decoder_weights(params, weight_dtype=jnp.float32)
    preds, h_new, c_new = jax.block_until_ready(
        decoder_decode(ids_seq, hidden, cell, prep_f32))
    assert jnp.allclose(preds, preds_r, rtol=1e-3, atol=1e-3)
    assert jnp.allclose(h_new, h_r, rtol=1e-3, atol=1e-3)
    assert jnp.allclose(c_new, c_r, rtol=1e-3, atol=1e-3)

    # fp32 single-step path (module's forward()).
    pred1, h1, c1 = jax.block_until_ready(
        decoder_forward(ids_seq[0], hidden, cell, prep_f32))
    assert jnp.allclose(pred1, pred1_r, rtol=1e-4, atol=1e-4)
    assert jnp.allclose(h1, h1_r, rtol=1e-4, atol=1e-4)
    assert jnp.allclose(c1, c1_r, rtol=1e-4, atol=1e-4)

    # bf16 weight path (default): halved weight DMA / VMEM residency, native bf16 MXU;
    # activations, gate math and accumulation stay f32 (v5e-safe).
    prep_bf16 = prepare_decoder_weights(params)
    preds_b, h_b, c_b = jax.block_until_ready(
        decoder_decode(ids_seq, hidden, cell, prep_bf16))
    assert float(jnp.max(jnp.abs(preds_b - preds_r))) < 2e-1
    assert float(jnp.max(jnp.abs(h_b - h_r))) < 2e-1
    assert float(jnp.max(jnp.abs(c_b - c_r))) < 2e-1

    print("KERNEL_OK")
</pallas_src>

<mosaic_0001>
module attributes {stable_mosaic.version = 11 : i64} {
  func.func @_decoder_kernel(%arg0: i32, %arg1: memref<1x8x1xi32, #tpu.memory_space<vmem>>, %arg2: memref<3x32xf32, #tpu.memory_space<vmem>>, %arg3: memref<2x65x128xf32, #tpu.memory_space<vmem>>, %arg4: memref<33x128xf32, #tpu.memory_space<vmem>>, %arg5: memref<2x8x32xf32, #tpu.memory_space<vmem>>, %arg6: memref<2x8x32xf32, #tpu.memory_space<vmem>>, %arg7: memref<1x8x128xf32, #tpu.memory_space<vmem>>, %arg8: memref<2x8x32xf32, #tpu.memory_space<vmem>>, %arg9: memref<2x8x32xf32, #tpu.memory_space<vmem>>, %arg10: memref<2x8x32xf32, #tpu.memory_space<vmem>>, %arg11: memref<2x8x32xf32, #tpu.memory_space<vmem>>) attributes {dimension_semantics = [#tpu.dimension_semantics<arbitrary>], iteration_bounds = array<i64: 6>, scalar_prefetch = 0 : i64, scratch_operands = 2 : i64, tpu.core_type = #tpu.core_type<tc>, window_params = [{transform_indices = @transform_0, window_bounds = array<i64: 1, 8, 1>}, {pipeline_mode = #tpu.pipeline_mode<synchronous>, transform_indices = @transform_1, window_bounds = array<i64: 3, 32>}, {pipeline_mode = #tpu.pipeline_mode<synchronous>, transform_indices = @transform_2, window_bounds = array<i64: 2, 65, 128>}, {pipeline_mode = #tpu.pipeline_mode<synchronous>, transform_indices = @transform_3, window_bounds = array<i64: 33, 128>}, {pipeline_mode = #tpu.pipeline_mode<synchronous>, transform_indices = @transform_4, window_bounds = array<i64: 2, 8, 32>}, {pipeline_mode = #tpu.pipeline_mode<synchronous>, transform_indices = @transform_5, window_bounds = array<i64: 2, 8, 32>}, {transform_indices = @transform_6, window_bounds = array<i64: 1, 8, 128>}, {pipeline_mode = #tpu.pipeline_mode<synchronous>, transform_indices = @transform_7, window_bounds = array<i64: 2, 8, 32>}, {pipeline_mode = #tpu.pipeline_mode<synchronous>, transform_indices = @transform_8, window_bounds = array<i64: 2, 8, 32>}]} {
    %c0_i32 = arith.constant 0 : i32
    %0 = arith.cmpi eq, %arg0, %c0_i32 : i32
    %1 = arith.extui %0 : i1 to i32
    %c0_i32_0 = arith.constant 0 : i32
    %2 = arith.cmpi ne, %1, %c0_i32_0 : i32
    scf.if %2 {
      %c0_46 = arith.constant 0 : index
      %c0_47 = arith.constant 0 : index
      %c0_48 = arith.constant 0 : index
      %85 = vector.load %arg5[%c0_46, %c0_47, %c0_48] : memref<2x8x32xf32, #tpu.memory_space<vmem>>, vector<2x8x32xf32>
      %c0_49 = arith.constant 0 : index
      %c0_50 = arith.constant 0 : index
      %c0_51 = arith.constant 0 : index
      %86 = vector.load %arg10[%c0_49, %c0_50, %c0_51] : memref<2x8x32xf32, #tpu.memory_space<vmem>>, vector<2x8x32xf32>
      tpu.vector_store %arg10[%c0_49, %c0_50, %c0_51], %85 {strides = array<i32>} : memref<2x8x32xf32, #tpu.memory_space<vmem>>, vector<2x8x32xf32>,
      %c0_52 = arith.constant 0 : index
      %c0_53 = arith.constant 0 : index
      %c0_54 = arith.constant 0 : index
      %87 = vector.load %arg6[%c0_52, %c0_53, %c0_54] : memref<2x8x32xf32, #tpu.memory_space<vmem>>, vector<2x8x32xf32>
      %c0_55 = arith.constant 0 : index
      %c0_56 = arith.constant 0 : index
      %c0_57 = arith.constant 0 : index
      %88 = vector.load %arg11[%c0_55, %c0_56, %c0_57] : memref<2x8x32xf32, #tpu.memory_space<vmem>>, vector<2x8x32xf32>
      tpu.vector_store %arg11[%c0_55, %c0_56, %c0_57], %87 {strides = array<i32>} : memref<2x8x32xf32, #tpu.memory_space<vmem>>, vector<2x8x32xf32>,
    } else {
    }
    %c0 = arith.constant 0 : index
    %c0_1 = arith.constant 0 : index
    %c0_2 = arith.constant 0 : index
    %3 = vector.load %arg1[%c0, %c0_1, %c0_2] : memref<1x8x1xi32, #tpu.memory_space<vmem>>, vector<1x8x1xi32>
    %4 = vector.shape_cast %3 : vector<1x8x1xi32> to vector<8x1xi32>
    %5 = tpu.iota {dimensions = array<i32: 1>} : vector<8x3xi32>
    %6 = vector.broadcast %4 : vector<8x1xi32> to vector<8x3xi32>
    %7 = arith.cmpi eq, %6, %5 : vector<8x3xi32>
    %8 = arith.extui %7 : vector<8x3xi1> to vector<8x3xi32>
    %9 = arith.sitofp %8 : vector<8x3xi32> to vector<8x3xf32>
    %c0_3 = arith.constant 0 : index
    %c0_4 = arith.constant 0 : index
    %10 = vector.load %arg2[%c0_3, %c0_4] : memref<3x32xf32, #tpu.memory_space<vmem>>, vector<3x32xf32>
    %cst = arith.constant dense<0.000000e+00> : vector<8x32xf32>
    %11 = tpu.matmul %9, %10, %cst {dimension_numbers = #tpu.dot_dimension_numbers<[1], [0], [0], [1], [0, 0, 1, 1], [], []>} : vector<8x3xf32>, vector<3x32xf32>, vector<8x32xf32> -> vector<8x32xf32>
    %cst_5 = arith.constant 1.000000e+00 : f32
    %12 = vector.broadcast %cst_5 : f32 to vector<8x1xf32>
    %13 = tpu.iota {dimensions = array<i32: 1>} : vector<8x128xi32>
    %c96_i32 = arith.constant 96 : i32
    %14 = vector.broadcast %c96_i32 : i32 to vector<8x128xi32>
    %15 = arith.cmpi slt, %13, %14 : vector<8x128xi32>
    %c0_6 = arith.constant 0 : index
    %c0_7 = arith.constant 0 : index
    %c0_8 = arith.constant 0 : index
    %16 = vector.load %arg10[%c0_6, %c0_7, %c0_8] : memref<2x8x32xf32, #tpu.memory_space<vmem>>, vector<1x8x32xf32>
    %17 = vector.shape_cast %16 : vector<1x8x32xf32> to vector<8x32xf32>
    %c0_9 = arith.constant 0 : index
    %c0_10 = arith.constant 0 : index
    %c0_11 = arith.constant 0 : index
    %18 = vector.load %arg11[%c0_9, %c0_10, %c0_11] : memref<2x8x32xf32, #tpu.memory_space<vmem>>, vector<1x8x32xf32>
    %19 = vector.shape_cast %18 : vector<1x8x32xf32> to vector<8x32xf32>
    %20 = tpu.concatenate %11, %17, %12 in 1 : vector<8x32xf32>, vector<8x32xf32>, vector<8x1xf32> -> vector<8x65xf32>
    %c0_12 = arith.constant 0 : index
    %c0_13 = arith.constant 0 : index
    %c0_14 = arith.constant 0 : index
    %21 = vector.load %arg3[%c0_12, %c0_13, %c0_14] : memref<2x65x128xf32, #tpu.memory_space<vmem>>, vector<1x65x128xf32>
    %22 = vector.shape_cast %21 : vector<1x65x128xf32> to vector<65x128xf32>
    %cst_15 = arith.constant dense<0.000000e+00> : vector<8x128xf32>
    %23 = tpu.matmul %20, %22, %cst_15 {dimension_numbers = #tpu.dot_dimension_numbers<[1], [0], [0], [1], [0, 0, 1, 1], [], []>} : vector<8x65xf32>, vector<65x128xf32>, vector<8x128xf32> -> vector<8x128xf32>
    %24 = arith.negf %23 : vector<8x128xf32>
    %25 = math.exp %24 : vector<8x128xf32>
    %cst_16 = arith.constant 1.000000e+00 : f32
    %26 = vector.broadcast %cst_16 : f32 to vector<8x128xf32>
    %27 = arith.addf %26, %25 : vector<8x128xf32>
    %28 = arith.divf %26, %27 : vector<8x128xf32>
    %29 = math.tanh %23 : vector<8x128xf32>
    %30 = arith.select %15, %28, %29 : vector<8x128xi1>, vector<8x128xf32>
    %31 = vector.extract_strided_slice %30 {offsets = [0, 0], sizes = [8, 32], strides = [1, 1]} : vector<8x128xf32> to vector<8x32xf32>
    %32 = vector.extract_strided_slice %30 {offsets = [0, 32], sizes = [8, 32], strides = [1, 1]} : vector<8x128xf32> to vector<8x32xf32>
    %33 = vector.extract_strided_slice %30 {offsets = [0, 64], sizes = [8, 32], strides = [1, 1]} : vector<8x128xf32> to vector<8x32xf32>
    %34 = vector.extract_strided_slice %30 {offsets = [0, 96], sizes = [8, 32], strides = [1, 1]} : vector<8x128xf32> to vector<8x32xf32>
    %35 = arith.mulf %32, %19 : vector<8x32xf32>
    %36 = arith.mulf %31, %34 : vector<8x32xf32>
    %37 = arith.addf %35, %36 : vector<8x32xf32>
    %38 = math.tanh %37 : vector<8x32xf32>
    %39 = arith.mulf %33, %38 : vector<8x32xf32>
    %c0_17 = arith.constant 0 : index
    %c0_18 = arith.constant 0 : index
    %c0_19 = arith.constant 0 : index
    %40 = vector.load %arg10[%c0_17, %c0_18, %c0_19] : memref<2x8x32xf32, #tpu.memory_space<vmem>>, vector<1x8x32xf32>
    %41 = vector.shape_cast %40 : vector<1x8x32xf32> to vector<8x32xf32>
    %42 = vector.shape_cast %39 : vector<8x32xf32> to vector<1x8x32xf32>
    tpu.vector_store %arg10[%c0_17, %c0_18, %c0_19], %42 {strides = array<i32>} : memref<2x8x32xf32, #tpu.memory_space<vmem>>, vector<1x8x32xf32>,
    %c0_20 = arith.constant 0 : index
    %c0_21 = arith.constant 0 : index
    %c0_22 = arith.constant 0 : index
    %43 = vector.load %arg11[%c0_20, %c0_21, %c0_22] : memref<2x8x32xf32, #tpu.memory_space<vmem>>, vector<1x8x32xf32>
    %44 = vector.shape_cast %43 : vector<1x8x32xf32> to vector<8x32xf32>
    %45 = vector.shape_cast %37 : vector<8x32xf32> to vector<1x8x32xf32>
    tpu.vector_store %arg11[%c0_20, %c0_21, %c0_22], %45 {strides = array<i32>} : memref<2x8x32xf32, #tpu.memory_space<vmem>>, vector<1x8x32xf32>,
    %c1 = arith.constant 1 : index
    %c0_23 = arith.constant 0 : index
    %c0_24 = arith.constant 0 : index
    %46 = vector.load %arg10[%c1, %c0_23, %c0_24] : memref<2x8x32xf32, #tpu.memory_space<vmem>>, vector<1x8x32xf32>
    %47 = vector.shape_cast %46 : vector<1x8x32xf32> to vector<8x32xf32>
    %c1_25 = arith.constant 1 : index
    %c0_26 = arith.constant 0 : index
    %c0_27 = arith.constant 0 : index
    %48 = vector.load %arg11[%c1_25, %c0_26, %c0_27] : memref<2x8x32xf32, #tpu.memory_space<vmem>>, vector<1x8x32xf32>
    %49 = vector.shape_cast %48 : vector<1x8x32xf32> to vector<8x32xf32>
    %50 = tpu.concatenate %39, %47, %12 in 1 : vector<8x32xf32>, vector<8x32xf32>, vector<8x1xf32> -> vector<8x65xf32>
    %c1_28 = arith.constant 1 : index
    %c0_29 = arith.constant 0 : index
    %c0_30 = arith.constant 0 : index
    %51 = vector.load %arg3[%c1_28, %c0_29, %c0_30] : memref<2x65x128xf32, #tpu.memory_space<vmem>>, vector<1x65x128xf32>
    %52 = vector.shape_cast %51 : vector<1x65x128xf32> to vector<65x128xf32>
    %cst_31 = arith.constant dense<0.000000e+00> : vector<8x128xf32>
    %53 = tpu.matmul %50, %52, %cst_31 {dimension_numbers = #tpu.dot_dimension_numbers<[1], [0], [0], [1], [0, 0, 1, 1], [], []>} : vector<8x65xf32>, vector<65x128xf32>, vector<8x128xf32> -> vector<8x128xf32>
    %54 = arith.negf %53 : vector<8x128xf32>
    %55 = math.exp %54 : vector<8x128xf32>
    %cst_32 = arith.constant 1.000000e+00 : f32
    %56 = vector.broadcast %cst_32 : f32 to vector<8x128xf32>
    %57 = arith.addf %56, %55 : vector<8x128xf32>
    %58 = arith.divf %56, %57 : vector<8x128xf32>
    %59 = math.tanh %53 : vector<8x128xf32>
    %60 = arith.select %15, %58, %59 : vector<8x128xi1>, vector<8x128xf32>
    %61 = vector.extract_strided_slice %60 {offsets = [0, 0], sizes = [8, 32], strides = [1, 1]} : vector<8x128xf32> to vector<8x32xf32>
    %62 = vector.extract_strided_slice %60 {offsets = [0, 32], sizes = [8, 32], strides = [1, 1]} : vector<8x128xf32> to vector<8x32xf32>
    %63 = vector.extract_strided_slice %60 {offsets = [0, 64], sizes = [8, 32], strides = [1, 1]} : vector<8x128xf32> to vector<8x32xf32>
    %64 = vector.extract_strided_slice %60 {offsets = [0, 96], sizes = [8, 32], strides = [1, 1]} : vector<8x128xf32> to vector<8x32xf32>
    %65 = arith.mulf %62, %49 : vector<8x32xf32>
    %66 = arith.mulf %61, %64 : vector<8x32xf32>
    %67 = arith.addf %65, %66 : vector<8x32xf32>
    %68 = math.tanh %67 : vector<8x32xf32>
    %69 = arith.mulf %63, %68 : vector<8x32xf32>
    %c1_33 = arith.constant 1 : index
    %c0_34 = arith.constant 0 : index
    %c0_35 = arith.constant 0 : index
    %70 = vector.load %arg10[%c1_33, %c0_34, %c0_35] : memref<2x8x32xf32, #tpu.memory_space<vmem>>, vector<1x8x32xf32>
    %71 = vector.shape_cast %70 : vector<1x8x32xf32> to vector<8x32xf32>
    %72 = vector.shape_cast %69 : vector<8x32xf32> to vector<1x8x32xf32>
    tpu.vector_store %arg10[%c1_33, %c0_34, %c0_35], %72 {strides = array<i32>} : memref<2x8x32xf32, #tpu.memory_space<vmem>>, vector<1x8x32xf32>,
    %c1_36 = arith.constant 1 : index
    %c0_37 = arith.constant 0 : index
    %c0_38 = arith.constant 0 : index
    %73 = vector.load %arg11[%c1_36, %c0_37, %c0_38] : memref<2x8x32xf32, #tpu.memory_space<vmem>>, vector<1x8x32xf32>
    %74 = vector.shape_cast %73 : vector<1x8x32xf32> to vector<8x32xf32>
    %75 = vector.shape_cast %67 : vector<8x32xf32> to vector<1x8x32xf32>
    tpu.vector_store %arg11[%c1_36, %c0_37, %c0_38], %75 {strides = array<i32>} : memref<2x8x32xf32, #tpu.memory_space<vmem>>, vector<1x8x32xf32>,
    %76 = tpu.concatenate %69, %12 in 1 : vector<8x32xf32>, vector<8x1xf32> -> vector<8x33xf32>
    %c0_39 = arith.constant 0 : index
    %c0_40 = arith.constant 0 : index
    %77 = vector.load %arg4[%c0_39, %c0_40] : memref<33x128xf32, #tpu.memory_space<vmem>>, vector<33x128xf32>
    %cst_41 = arith.constant dense<0.000000e+00> : vector<8x128xf32>
    %78 = tpu.matmul %76, %77, %cst_41 {dimension_numbers = #tpu.dot_dimension_numbers<[1], [0], [0], [1], [0, 0, 1, 1], [], []>} : vector<8x33xf32>, vector<33x128xf32>, vector<8x128xf32> -> vector<8x128xf32>
    %c0_42 = arith.constant 0 : index
    %c0_43 = arith.constant 0 : index
    %c0_44 = arith.constant 0 : index
    %79 = vector.load %arg7[%c0_42, %c0_43, %c0_44] : memref<1x8x128xf32, #tpu.memory_space<vmem>>, vector<1x8x128xf32>
    %80 = vector.shape_cast %79 : vector<1x8x128xf32> to vector<8x128xf32>
    %81 = vector.shape_cast %78 : vector<8x128xf32> to vector<1x8x128xf32>
    tpu.vector_store %arg7[%c0_42, %c0_43, %c0_44], %81 {strides = array<i32>} : memref<1x8x128xf32, #tpu.memory_space<vmem>>, vector<1x8x128xf32>,
    %c5_i32 = arith.constant 5 : i32
    %82 = arith.cmpi eq, %arg0, %c5_i32 : i32
    %83 = arith.extui %82 : i1 to i32
    %c0_i32_45 = arith.constant 0 : i32
    %84 = arith.cmpi ne, %83, %c0_i32_45 : i32
    scf.if %84 {
      %c0_46 = arith.constant 0 : index
      %c0_47 = arith.constant 0 : index
      %c0_48 = arith.constant 0 : index
      %85 = vector.load %arg10[%c0_46, %c0_47, %c0_48] : memref<2x8x32xf32, #tpu.memory_space<vmem>>, vector<2x8x32xf32>
      %c0_49 = arith.constant 0 : index
      %c0_50 = arith.constant 0 : index
      %c0_51 = arith.constant 0 : index
      %86 = vector.load %arg8[%c0_49, %c0_50, %c0_51] : memref<2x8x32xf32, #tpu.memory_space<vmem>>, vector<2x8x32xf32>
      tpu.vector_store %arg8[%c0_49, %c0_50, %c0_51], %85 {strides = array<i32>} : memref<2x8x32xf32, #tpu.memory_space<vmem>>, vector<2x8x32xf32>,
      %c0_52 = arith.constant 0 : index
      %c0_53 = arith.constant 0 : index
      %c0_54 = arith.constant 0 : index
      %87 = vector.load %arg11[%c0_52, %c0_53, %c0_54] : memref<2x8x32xf32, #tpu.memory_space<vmem>>, vector<2x8x32xf32>
      %c0_55 = arith.constant 0 : index
      %c0_56 = arith.constant 0 : index
      %c0_57 = arith.constant 0 : index
      %88 = vector.load %arg9[%c0_55, %c0_56, %c0_57] : memref<2x8x32xf32, #tpu.memory_space<vmem>>, vector<2x8x32xf32>
      tpu.vector_store %arg9[%c0_55, %c0_56, %c0_57], %87 {strides = array<i32>} : memref<2x8x32xf32, #tpu.memory_space<vmem>>, vector<2x8x32xf32>,
    } else {
    }
    return
  }
  func.func @transform_0(%arg0: i32) -> (i32, i32, i32) {
    %c0_i32 = arith.constant 0 : i32
    %c0_i32_0 = arith.constant 0 : i32
    %c0_i32_1 = arith.constant 0 : i32
    return %arg0, %c0_i32, %c0_i32_0 : i32, i32, i32
  }
  func.func @transform_1(%arg0: i32) -> (i32, i32) {
    %c0_i32 = arith.constant 0 : i32
    %c0_i32_0 = arith.constant 0 : i32
    %c0_i32_1 = arith.constant 0 : i32
    return %c0_i32, %c0_i32_0 : i32, i32
  }
  func.func @transform_2(%arg0: i32) -> (i32, i32, i32) {
    %c0_i32 = arith.constant 0 : i32
    %c0_i32_0 = arith.constant 0 : i32
    %c0_i32_1 = arith.constant 0 : i32
    %c0_i32_2 = arith.constant 0 : i32
    return %c0_i32, %c0_i32_0, %c0_i32_1 : i32, i32, i32
  }
  func.func @transform_3(%arg0: i32) -> (i32, i32) {
    %c0_i32 = arith.constant 0 : i32
    %c0_i32_0 = arith.constant 0 : i32
    %c0_i32_1 = arith.constant 0 : i32
    return %c0_i32, %c0_i32_0 : i32, i32
  }
  func.func @transform_4(%arg0: i32) -> (i32, i32, i32) {
    %c0_i32 = arith.constant 0 : i32
    %c0_i32_0 = arith.constant 0 : i32
    %c0_i32_1 = arith.constant 0 : i32
    %c0_i32_2 = arith.constant 0 : i32
    return %c0_i32, %c0_i32_0, %c0_i32_1 : i32, i32, i32
  }
  func.func @transform_5(%arg0: i32) -> (i32, i32, i32) {
    %c0_i32 = arith.constant 0 : i32
    %c0_i32_0 = arith.constant 0 : i32
    %c0_i32_1 = arith.constant 0 : i32
    %c0_i32_2 = arith.constant 0 : i32
    return %c0_i32, %c0_i32_0, %c0_i32_1 : i32, i32, i32
  }
  func.func @transform_6(%arg0: i32) -> (i32, i32, i32) {
    %c0_i32 = arith.constant 0 : i32
    %c0_i32_0 = arith.constant 0 : i32
    %c0_i32_1 = arith.constant 0 : i32
    return %arg0, %c0_i32, %c0_i32_0 : i32, i32, i32
  }
  func.func @transform_7(%arg0: i32) -> (i32, i32, i32) {
    %c0_i32 = arith.constant 0 : i32
    %c0_i32_0 = arith.constant 0 : i32
    %c0_i32_1 = arith.constant 0 : i32
    %c0_i32_2 = arith.constant 0 : i32
    return %c0_i32, %c0_i32_0, %c0_i32_1 : i32, i32, i32
  }
  func.func @transform_8(%arg0: i32) -> (i32, i32, i32) {
    %c0_i32 = arith.constant 0 : i32
    %c0_i32_0 = arith.constant 0 : i32
    %c0_i32_1 = arith.constant 0 : i32
    %c0_i32_2 = arith.constant 0 : i32
    return %c0_i32, %c0_i32_0, %c0_i32_1 : i32, i32, i32
  }
}

</mosaic_0001>

<llo_original>
// kernel: tpu_custom_call.1
$region0: #{tpu_custom_call.1}
  #allocation0 [shape = 'u32[]', space=smem, size = 0x4, offset = 0x4, fixed_abs, tag = 'smem constant byte address 0x4 - core index']
  #allocation1 [shape = 'u32[144,128]{1,0:T(1,128)}', space=vmem, size = 0x12000, scoped, tag = 'internal scratch']
  #allocation2 [shape = 'f32[2,8,32]{2,1,0:T(8,128)}', space=vmem, size = 0x2000, scoped, tag = 'scratch operand']
  #allocation3 [shape = 'f32[2,8,32]{2,1,0:T(8,128)}', space=vmem, size = 0x2000, scoped, tag = 'scratch operand']
  %s0 = inlined_call_operand.vmem [shape: s32[6,8,1], index: 0, kind: input, shape index: {}]
  %s1 = inlined_call_operand.vmem [shape: f32[3,32], index: 1, kind: input, shape index: {}]
  %s2 = inlined_call_operand.vmem [shape: f32[2,65,128], index: 2, kind: input, shape index: {}]
  %s3 = inlined_call_operand.vmem [shape: f32[33,128], index: 3, kind: input, shape index: {}]
  %s4 = inlined_call_operand.vmem [shape: f32[2,8,32], index: 4, kind: input, shape index: {}]
  %s5 = inlined_call_operand.vmem [shape: f32[2,8,32], index: 5, kind: input, shape index: {}]
  %s6 = inlined_call_operand.hbm [shape: f32[6,8,128], index: 6, kind: output, shape index: {0}]
  %s7 = inlined_call_operand.hbm [shape: f32[2,8,32], index: 7, kind: output, shape index: {1}]
  %s8 = inlined_call_operand.hbm [shape: f32[2,8,32], index: 8, kind: output, shape index: {2}]
  %9 = xla_tuple %s6, %s7, %s8
  %s10 = sld [smem:[#allocation0]]
  $region81: #{tpu_custom_call.1} parent=0
    _
  %s12 = ssub.s32 1, %s10
  %s13 = scalar_select 0, %s12, %s10
  $region1: #{tpu_custom_call.1} parent=0
    #allocation4 [shape = 'u8[8192]{0}', space=vmem, size = 0x2000, scoped, tag = 'output window, operand 0']
    #allocation5 [shape = 's32[2]{0}', space=sflag, size = 0x8, scoped, tag = 'scoped memory for tpu_custom_call.1']
    #allocation6 [shape = 'u8[8192]{0}', space=vmem, size = 0x2000, scoped, tag = 'output window, operand 1, single buffered']
    #allocation7 [shape = 's32[1]{0}', space=sflag, size = 0x4, scoped, tag = 'scoped memory for tpu_custom_call.1']
    #allocation8 [shape = 'u8[8192]{0}', space=vmem, size = 0x2000, scoped, tag = 'output window, operand 2, single buffered']
    %14 = vsyncpa [#allocation5], 0
    %s15 = scalar_lea.sflag [#allocation5], 1
    %16 = vsyncpa %s15, 0
    %17 = vsyncpa [#allocation7], 0
    loop: start=0, step=1, limit=8
    $region2: #{tpu_custom_call.1} parent=1 // loop_pre_header
      _
    $region3: #{tpu_custom_call.1} parent=1 // loop_header
      %s19 = sphi 0, %s23
      %p20 = scmp.ge.s32.totalorder %s19, 8
      %s29 = sphi 0, %s31
      %s32 = sphi 0, %s29
      %s33 = sphi 0, %s32
      %s49 = sphi 0, %s33
      %s53 = sphi 0, %s53
      %s55 = sphi 0, %s53
      %s56 = sphi 0, %s55
      %s70 = sphi 0, %s56
      %s74 = sphi 0, %s74
      %s76 = sphi 0, %s74
      %s77 = sphi 0, %s76
      %s91 = sphi 0, %s77
      %s95 = sphi 0, %s95
      %s97 = sphi 0, %s95
      %s98 = sphi 0, %s97
      %s112 = sphi 0, %s98
      %s116 = sphi 0, %s116
      %s118 = sphi 0, %s116
      %s119 = sphi 0, %s118
      %s133 = sphi 0, %s119
      %s137 = sphi 0, %s137
      %s139 = sphi 0, %s137
      %s140 = sphi 0, %s139
      %s154 = sphi 0, %s140
      %s160 = sphi 0, %s162
      %s163 = sphi 0, %s160
      %s164 = sphi 0, %s163
      %s180 = sphi 0, %s164
      %s184 = sphi 0, %s184
      %s186 = sphi 0, %s184
      %s187 = sphi 0, %s186
      %s201 = sphi 0, %s187
      %s205 = sphi 0, %s205
      %s207 = sphi 0, %s205
      %s208 = sphi 0, %s207
      %s222 = sphi 0, %s208
    $region4: #{tpu_custom_call.1} parent=1 // loop_header_branch
      %22 = sbr.rel (%p20) target = $region8
    $region5: #{tpu_custom_call.1} parent=1 // loop_body
      %s24 = ssub.s32 %s19, 1
      %s25 = ssub.s32 %s19, 2
      %s26 = sadd.s32 %s19, 1
      %s27 = ssub.s32 %s19, %s26
      %p28 = scmp.eq.s32.totalorder %s27, 0
      %s30 = sadd.s32 %s29, 1
      %s31 = scalar_select %p28, %s29, %s30
      %p34 = pneg %p28
      %p35 = scmp.eq.s32.totalorder %s19, 5
      %p36 = por %p34, %p35
      %p37 = scmp.ne.s32.totalorder %s29, %s32
      %p38 = scmp.eq.s32.totalorder %s19, 0
      %p39 = por %p37, %p38
      %p40 = scmp.ne.s32.totalorder %s29, %s32
      %p41 = scmp.eq.s32.totalorder %s24, 5
      %p42 = por %p40, %p41
      %p43 = scmp.ne.s32.totalorder %s32, %s33
      %p44 = scmp.eq.s32.totalorder %s24, 0
      %p45 = por %p43, %p44
      %p46 = scmp.ne.s32.totalorder %s32, %s33
      %p47 = scmp.eq.s32.totalorder %s25, 5
      %p48 = por %p46, %p47
      %p50 = scmp.ne.s32.totalorder %s33, %s49
      %p51 = scmp.eq.s32.totalorder %s25, 0
      %p52 = por %p50, %p51
      %s54 = sadd.s32 %s53, 1
      %p57 = scmp.eq.s32.totalorder %s19, 5
      %p58 = scmp.ne.s32.totalorder %s53, %s55
      %p59 = scmp.eq.s32.totalorder %s19, 0
      %p60 = por %p58, %p59
      %p61 = scmp.ne.s32.totalorder %s53, %s55
      %p62 = scmp.eq.s32.totalorder %s24, 5
      %p63 = por %p61, %p62
      %p64 = scmp.ne.s32.totalorder %s55, %s56
      %p65 = scmp.eq.s32.totalorder %s24, 0
      %p66 = por %p64, %p65
      %p67 = scmp.ne.s32.totalorder %s55, %s56
      %p68 = scmp.eq.s32.totalorder %s25, 5
      %p69 = por %p67, %p68
      %p71 = scmp.ne.s32.totalorder %s56, %s70
      %p72 = scmp.eq.s32.totalorder %s25, 0
      %p73 = por %p71, %p72
      %s75 = sadd.s32 %s74, 1
      %p78 = scmp.eq.s32.totalorder %s19, 5
      %p79 = scmp.ne.s32.totalorder %s74, %s76
      %p80 = scmp.eq.s32.totalorder %s19, 0
      %p81 = por %p79, %p80
      %p82 = scmp.ne.s32.totalorder %s74, %s76
      %p83 = scmp.eq.s32.totalorder %s24, 5
      %p84 = por %p82, %p83
      %p85 = scmp.ne.s32.totalorder %s76, %s77
      %p86 = scmp.eq.s32.totalorder %s24, 0
      %p87 = por %p85, %p86
      %p88 = scmp.ne.s32.totalorder %s76, %s77
      %p89 = scmp.eq.s32.totalorder %s25, 5
      %p90 = por %p88, %p89
      %p92 = scmp.ne.s32.totalorder %s77, %s91
      %p93 = scmp.eq.s32.totalorder %s25, 0
      %p94 = por %p92, %p93
      %s96 = sadd.s32 %s95, 1
      %p99 = scmp.eq.s32.totalorder %s19, 5
      %p100 = scmp.ne.s32.totalorder %s95, %s97
      %p101 = scmp.eq.s32.totalorder %s19, 0
      %p102 = por %p100, %p101
      %p103 = scmp.ne.s32.totalorder %s95, %s97
      %p104 = scmp.eq.s32.totalorder %s24, 5
      %p105 = por %p103, %p104
      %p106 = scmp.ne.s32.totalorder %s97, %s98
      %p107 = scmp.eq.s32.totalorder %s24, 0
      %p108 = por %p106, %p107
      %p109 = scmp.ne.s32.totalorder %s97, %s98
      %p110 = scmp.eq.s32.totalorder %s25, 5
      %p111 = por %p109, %p110
      %p113 = scmp.ne.s32.totalorder %s98, %s112
      %p114 = scmp.eq.s32.totalorder %s25, 0
      %p115 = por %p113, %p114
      %s117 = sadd.s32 %s116, 1
      %p120 = scmp.eq.s32.totalorder %s19, 5
      %p121 = scmp.ne.s32.totalorder %s116, %s118
      %p122 = scmp.eq.s32.totalorder %s19, 0
      %p123 = por %p121, %p122
      %p124 = scmp.ne.s32.totalorder %s116, %s118
      %p125 = scmp.eq.s32.totalorder %s24, 5
      %p126 = por %p124, %p125
      %p127 = scmp.ne.s32.totalorder %s118, %s119
      %p128 = scmp.eq.s32.totalorder %s24, 0
      %p129 = por %p127, %p128
      %p130 = scmp.ne.s32.totalorder %s118, %s119
      %p131 = scmp.eq.s32.totalorder %s25, 5
      %p132 = por %p130, %p131
      %p134 = scmp.ne.s32.totalorder %s119, %s133
      %p135 = scmp.eq.s32.totalorder %s25, 0
      %p136 = por %p134, %p135
      %s138 = sadd.s32 %s137, 1
      %p141 = scmp.eq.s32.totalorder %s19, 5
      %p142 = scmp.ne.s32.totalorder %s137, %s139
      %p143 = scmp.eq.s32.totalorder %s19, 0
      %p144 = por %p142, %p143
      %p145 = scmp.ne.s32.totalorder %s137, %s139
      %p146 = scmp.eq.s32.totalorder %s24, 5
      %p147 = por %p145, %p146
      %p148 = scmp.ne.s32.totalorder %s139, %s140
      %p149 = scmp.eq.s32.totalorder %s24, 0
      %p150 = por %p148, %p149
      %p151 = scmp.ne.s32.totalorder %s139, %s140
      %p152 = scmp.eq.s32.totalorder %s25, 5
      %p153 = por %p151, %p152
      %p155 = scmp.ne.s32.totalorder %s140, %s154
      %p156 = scmp.eq.s32.totalorder %s25, 0
      %p157 = por %p155, %p156
      %s158 = ssub.s32 %s19, %s26
      %p159 = scmp.eq.s32.totalorder %s158, 0
      %s161 = sadd.s32 %s160, 1
      %s162 = scalar_select %p159, %s160, %s161
      %p165 = pneg %p159
      %p166 = scmp.eq.s32.totalorder %s19, 5
      %p167 = por %p165, %p166
      %p168 = scmp.ne.s32.totalorder %s160, %s163
      %p169 = scmp.eq.s32.totalorder %s19, 0
      %p170 = por %p168, %p169
      %p171 = scmp.ne.s32.totalorder %s160, %s163
      %p172 = scmp.eq.s32.totalorder %s24, 5
      %p173 = por %p171, %p172
      %p174 = scmp.ne.s32.totalorder %s163, %s164
      %p175 = scmp.eq.s32.totalorder %s24, 0
      %p176 = por %p174, %p175
      %p177 = scmp.ne.s32.totalorder %s163, %s164
      %p178 = scmp.eq.s32.totalorder %s25, 5
      %p179 = por %p177, %p178
      %p181 = scmp.ne.s32.totalorder %s164, %s180
      %p182 = scmp.eq.s32.totalorder %s25, 0
      %p183 = por %p181, %p182
      %s185 = sadd.s32 %s184, 1
      %p188 = scmp.eq.s32.totalorder %s19, 5
      %p189 = scmp.ne.s32.totalorder %s184, %s186
      %p190 = scmp.eq.s32.totalorder %s19, 0
      %p191 = por %p189, %p190
      %p192 = scmp.ne.s32.totalorder %s184, %s186
      %p193 = scmp.eq.s32.totalorder %s24, 5
      %p194 = por %p192, %p193
      %p195 = scmp.ne.s32.totalorder %s186, %s187
      %p196 = scmp.eq.s32.totalorder %s24, 0
      %p197 = por %p195, %p196
      %p198 = scmp.ne.s32.totalorder %s186, %s187
      %p199 = scmp.eq.s32.totalorder %s25, 5
      %p200 = por %p198, %p199
      %p202 = scmp.ne.s32.totalorder %s187, %s201
      %p203 = scmp.eq.s32.totalorder %s25, 0
      %p204 = por %p202, %p203
      %s206 = sadd.s32 %s205, 1
      %p209 = scmp.eq.s32.totalorder %s19, 5
      %p210 = scmp.ne.s32.totalorder %s205, %s207
      %p211 = scmp.eq.s32.totalorder %s19, 0
      %p212 = por %p210, %p211
      %p213 = scmp.ne.s32.totalorder %s205, %s207
      %p214 = scmp.eq.s32.totalorder %s24, 5
      %p215 = por %p213, %p214
      %p216 = scmp.ne.s32.totalorder %s207, %s208
      %p217 = scmp.eq.s32.totalorder %s24, 0
      %p218 = por %p216, %p217
      %p219 = scmp.ne.s32.totalorder %s207, %s208
      %p220 = scmp.eq.s32.totalorder %s25, 5
      %p221 = por %p219, %p220
      %p223 = scmp.ne.s32.totalorder %s208, %s222
      %p224 = scmp.eq.s32.totalorder %s25, 0
      %p225 = por %p223, %p224
      %p226 = scmp.le.s32.totalorder 1, %s19
      %p227 = scmp.lt.s32.totalorder %s19, 7
      %p228 = pnand %p226, %p227
      %p229 = pneg %p228
      // Predicated region
      $region9: #{tpu_custom_call.1} parent=5 // pred_check
        _
      $region10: #{tpu_custom_call.1} parent=5 // pred_check_branch
        %231 = sbr.rel (%p228) target = $region12
      $region11: #{tpu_custom_call.1} parent=5 // pred_region
        %s232 = ssub.s32 %s19, 1
        // Predicated region
        $region13: #{tpu_custom_call.1} parent=11 // pred_check
          %p233 = pneg %p66
        $region14: #{tpu_custom_call.1} parent=11 // pred_check_branch
          %235 = sbr.rel (%p233) target = $region16
        $region15: #{tpu_custom_call.1} parent=11 // pred_region
          _
        $region16: #{tpu_custom_call.1} parent=11 // pred_fallthru
          _
        // Predicated region
        $region17: #{tpu_custom_call.1} parent=11 // pred_check
          %p236 = pneg %p87
        $region18: #{tpu_custom_call.1} parent=11 // pred_check_branch
          %238 = sbr.rel (%p236) target = $region20
        $region19: #{tpu_custom_call.1} parent=11 // pred_region
          _
        $region20: #{tpu_custom_call.1} parent=11 // pred_fallthru
          _
        // Predicated region
        $region21: #{tpu_custom_call.1} parent=11 // pred_check
          %p239 = pneg %p108
        $region22: #{tpu_custom_call.1} parent=11 // pred_check_branch
          %241 = sbr.rel (%p239) target = $region24
        $region23: #{tpu_custom_call.1} parent=11 // pred_region
          _
        $region24: #{tpu_custom_call.1} parent=11 // pred_fallthru
          _
        // Predicated region
        $region25: #{tpu_custom_call.1} parent=11 // pred_check
          %p242 = pneg %p129
        $region26: #{tpu_custom_call.1} parent=11 // pred_check_branch
          %244 = sbr.rel (%p242) target = $region28
        $region27: #{tpu_custom_call.1} parent=11 // pred_region
          _
        $region28: #{tpu_custom_call.1} parent=11 // pred_fallthru
          _
        // Predicated region
        $region29: #{tpu_custom_call.1} parent=11 // pred_check
          %p245 = pneg %p150
        $region30: #{tpu_custom_call.1} parent=11 // pred_check_branch
          %247 = sbr.rel (%p245) target = $region32
        $region31: #{tpu_custom_call.1} parent=11 // pred_region
          _
        $region32: #{tpu_custom_call.1} parent=11 // pred_fallthru
          _
      $region12: #{tpu_custom_call.1} parent=5 // pred_fallthru
        _
      %p248 = scmp.lt.s32.totalorder %s19, 6
      // Predicated region
      $region33: #{tpu_custom_call.1} parent=5 // pred_check
        %p249 = pneg %p248
      $region34: #{tpu_custom_call.1} parent=5 // pred_check_branch
        %251 = sbr.rel (%p249) target = $region36
      $region35: #{tpu_custom_call.1} parent=5 // pred_region
        // Predicated region
        $region37: #{tpu_custom_call.1} parent=35 // pred_check
          %p252 = pneg %p39
        $region38: #{tpu_custom_call.1} parent=35 // pred_check_branch
          %254 = sbr.rel (%p252) target = $region40
        $region39: #{tpu_custom_call.1} parent=35 // pred_region
          %p255 = scmp.lt.s32.totalorder %s19, 5
          %s256 = scalar_select %p255, %s19, 5
          %s257 = smul.addr %s256, 8
          %s258 = scalar_lea.vmem %s0, %s257
        $region40: #{tpu_custom_call.1} parent=35 // pred_fallthru
          _
      $region36: #{tpu_custom_call.1} parent=5 // pred_fallthru
        _
      %p259 = scmp.le.s32.totalorder 1, %s19
      %p260 = scmp.lt.s32.totalorder %s19, 7
      %p261 = pnand %p259, %p260
      %p262 = pneg %p261
      // Predicated region
      $region41: #{tpu_custom_call.1} parent=5 // pred_check
        _
      $region42: #{tpu_custom_call.1} parent=5 // pred_check_branch
        %264 = sbr.rel (%p261) target = $region44
      $region43: #{tpu_custom_call.1} parent=5 // pred_region
        %s265 = ssub.s32 %s19, 1
        %p266 = scmp.lt.s32.totalorder %s24, 5
        %s267 = scalar_select %p266, %s24, 5
        %s268 = smul.addr %s267, 8
        %s269 = scalar_lea.vmem %s0, %s268
        %p270 = pneg %p45
        %p271 = pneg %p42
        %p272 = pneg %p66
        %p273 = pneg %p63
        %p274 = pneg %p87
        %p275 = pneg %p84
        %p276 = pneg %p108
        %p277 = pneg %p105
        %p278 = pneg %p129
        %p279 = pneg %p126
        %p280 = pneg %p150
        %p281 = pneg %p147
        %p282 = pneg %p176
        %p283 = pneg %p173
        %s284 = sand.u32 %s163, 1
        %s285 = scalar_lea.sflag [#allocation5], %s284
        %s286 = sand.u32 %s163, 1
        %s287 = smul.addr %s286, 8
        %s288 = scalar_lea.vmem [#allocation4], %s287
        %p289 = pneg %p197
        %p290 = pneg %p194
        %p291 = pneg %p218
        %p292 = pneg %p215
        %p293 = scmp.lt.s32.totalorder %s24, 5
        %s294 = scalar_select %p293, %s24, 5
        %s295 = smul.addr %s294, 8
        %s296 = scalar_lea.vmem %s0, %s295
        %p297 = scmp.eq.s32.totalorder %s24, 0
        // Predicated region
        $region45: #{tpu_custom_call.1} parent=43 // pred_check
          %p298 = pneg %p297
        $region46: #{tpu_custom_call.1} parent=43 // pred_check_branch
          %300 = sbr.rel (%p298) target = $region48
        $region47: #{tpu_custom_call.1} parent=43 // pred_region
          %v301 = vld [vmem:[%s4] sm:$0xff]
          %v302 = vld [vmem:[%s4 + $0x8] sm:$0xff]
          %vm303 = vcmask 261120
          %304 = vst.msk [vmem:[#allocation2] sm:$0xff] %vm303, %v301
          %305 = vst.msk [vmem:[#allocation2 + $0x8] sm:$0xff] %vm303, %v302
          %v306 = vld [vmem:[%s5] sm:$0xff]
          %v307 = vld [vmem:[%s5 + $0x8] sm:$0xff]
          %308 = vst.msk [vmem:[#allocation3] sm:$0xff] %vm303, %v306
          %309 = vst.msk [vmem:[#allocation3 + $0x8] sm:$0xff] %vm303, %v307
        $region48: #{tpu_custom_call.1} parent=43 // pred_fallthru
          _
        %v310 = vld [vmem:[%s296] sm:$0xff]
        %v311 = vlaneseq
        %v312 = vand.u32 %v311, 127
        %313 = vset.pattern.permute.xlu0 0
        %314 = vperm.xlu0 %313, %v310
        %v315 = vpop.permute.xlu0 %314
        %vm316 = vcmp.eq.s32.totalorder %v315, %v312
        %v317 = vsel %vm316, 1, 0
        %v318 = vcvt.s32.f32 %v317
        %v319 = vld [vmem:[%s1] sm:$0x7]
        %vm320 = vcmask 23552
        %v322 = vsel %vm320, %v318, 0
        %vm324 = vcmask 1042432
        %v326 = vsel %vm324, %v319, 0
        %328 = vmatprep.subr.mxu0 0.0
        %329 = vmatpush1.msra.mxu0 %v326
        %330 = vmatprep.subr.mxu0 0.0
        %331 = vmatpush1.msra.mxu0 0.0
        %332 = vmatprep.subr.mxu0 0.0
        %333 = vmatpush1.msra.mxu0 0.0
        %334 = vmatprep.subr.mxu0 0.0
        %335 = vmatpush1.msra.mxu0 0.0
        %336 = vmatprep.subr.mxu0 0.0
        %337 = vmatpush1.msra.mxu0 0.0
        %338 = vmatprep.subr.mxu0 0.0
        %339 = vmatpush1.msra.mxu0 0.0
        %340 = vmatprep.subr.mxu0 0.0
        %341 = vmatpush1.msra.mxu0 0.0
        %342 = vmatprep.subr.mxu0 0.0
        %343 = vmatpush1.msra.mxu0 0.0
        %344 = vmatprep.subr.mxu0 0.0
        %345 = vmatpush1.msra.mxu0 0.0
        %346 = vmatprep.subr.mxu0 0.0
        %347 = vmatpush1.msra.mxu0 0.0
        %348 = vmatprep.subr.mxu0 0.0
        %349 = vmatpush1.msra.mxu0 0.0
        %350 = vmatprep.subr.mxu0 0.0
        %351 = vmatpush1.msra.mxu0 0.0
        %352 = vmatprep.subr.mxu0 0.0
        %353 = vmatpush1.msra.mxu0 0.0
        %354 = vmatprep.subr.mxu0 0.0
        %355 = vmatpush1.msra.mxu0 0.0
        %356 = vmatprep.subr.mxu0 0.0
        %357 = vmatpush1.msra.mxu0 0.0
        %358 = vmatprep.subr.mxu0 0.0
        %359 = vmatpush1.msra.mxu0 0.0
        %360 = vmatprep.subr.mxu0 0.0
        %361 = vmatpush1.msra.mxu0 0.0
        %362 = vmatprep.subr.mxu0 0.0
        %363 = vmatpush1.msra.mxu0 0.0
        %364 = vmatprep.subr.mxu0 0.0
        %365 = vmatpush1.msra.mxu0 0.0
        %366 = vmatprep.subr.mxu0 0.0
        %367 = vmatpush1.msra.mxu0 0.0
        %368 = vmatprep.subr.mxu0 0.0
        %369 = vmatpush1.msra.mxu0 0.0
        %370 = vmatprep.subr.mxu0 0.0
        %371 = vmatpush1.msra.mxu0 0.0
        %372 = vmatprep.subr.mxu0 0.0
        %373 = vmatpush1.msra.mxu0 0.0
        %374 = vmatprep.subr.mxu0 0.0
        %375 = vmatpush1.msra.mxu0 0.0
        %376 = vmatprep.subr.mxu0 0.0
        %377 = vmatpush1.msra.mxu0 0.0
        %378 = vmatprep.subr.mxu0 0.0
        %379 = vmatpush1.msra.mxu0 0.0
        %380 = vmatprep.subr.mxu0 0.0
        %381 = vmatpush1.msra.mxu0 0.0
        %382 = vmatprep.subr.mxu0 0.0
        %383 = vmatpush1.msra.mxu0 0.0
        %384 = vmatprep.subr.mxu0 0.0
        %385 = vmatpush1.msra.mxu0 0.0
        %386 = vmatprep.subr.mxu0 0.0
        %387 = vmatpush1.msra.mxu0 0.0
        %388 = vmatprep.subr.mxu0 0.0
        %389 = vmatpush1.msra.mxu0 0.0
        %390 = vmatprep.subr.mxu0 0.0
        %391 = vmatpush1.msra.mxu0 0.0
        %392 = vmatprep.mubr.f32.mxu0 0.0
        %393 = vmatmul.mubr.f32.gmra.mrb[0].mxu0 %v322
        %v394 = vpop.f32.mrb[0].mxu0
        %v395 = vadd.f32 0.0, %v394
        %v396 = vpop.f32.mrb[0].mxu0
        %397 = vdwg.mxu0
        %vm398 = vcmp.lt.s32.totalorder %v312, 96
        %v399 = vld [vmem:[#allocation2] sm:$0xff]
        %v400 = vld [vmem:[#allocation3] sm:$0xff]
        %402 = vrot.lane.b32.xlu0 %v399, 32
        %v403 = vpop.permute.xlu0 %402
        %vm405 = vcmask 261120
        %v406 = vsel %vm405, %v395, %v403
        %vm407 = vcmask 523264
        %v408 = vsel %vm407, %v406, 1.0
        %v409 = vld [vmem:[%s2] sm:$0xff]
        %v410 = vld [vmem:[%s2 + $0x8] sm:$0xff]
        %v411 = vld [vmem:[%s2 + $0x10] sm:$0xff]
        %v412 = vld [vmem:[%s2 + $0x18] sm:$0xff]
        %v413 = vld [vmem:[%s2 + $0x20] sm:$0xff]
        %v414 = vld [vmem:[%s2 + $0x28] sm:$0xff]
        %v415 = vld [vmem:[%s2 + $0x30] sm:$0xff]
        %v416 = vld [vmem:[%s2 + $0x38] sm:$0xff]
        %v417 = vld [vmem:[%s2 + $0x40] sm:$0x1]
        %vm418 = vcmask 531456
        %v420 = vsel %vm418, %v408, 0
        %vm422 = vcmask 1040384
        %v424 = vsel %vm422, %v417, 0
        %426 = vmatprep.subr.mxu0 0.0
        %427 = vmatpush1.msra.mxu0 %v409
        %428 = vmatprep.subr.mxu0 0.0
        %429 = vmatpush1.msra.mxu0 %v410
        %430 = vmatprep.subr.mxu0 0.0
        %431 = vmatpush1.msra.mxu0 %v411
        %432 = vmatprep.subr.mxu0 0.0
        %433 = vmatpush1.msra.mxu0 %v412
        %434 = vmatprep.subr.mxu0 0.0
        %435 = vmatpush1.msra.mxu0 %v413
        %436 = vmatprep.subr.mxu0 0.0
        %437 = vmatpush1.msra.mxu0 %v414
        %438 = vmatprep.subr.mxu0 0.0
        %439 = vmatpush1.msra.mxu0 %v415
        %440 = vmatprep.subr.mxu0 0.0
        %441 = vmatpush1.msra.mxu0 %v416
        %442 = vmatprep.subr.mxu0 0.0
        %443 = vmatpush1.msra.mxu0 %v424
        %444 = vmatprep.subr.mxu0 0.0
        %445 = vmatpush1.msra.mxu0 0.0
        %446 = vmatprep.subr.mxu0 0.0
        %447 = vmatpush1.msra.mxu0 0.0
        %448 = vmatprep.subr.mxu0 0.0
        %449 = vmatpush1.msra.mxu0 0.0
        %450 = vmatprep.subr.mxu0 0.0
        %451 = vmatpush1.msra.mxu0 0.0
        %452 = vmatprep.subr.mxu0 0.0
        %453 = vmatpush1.msra.mxu0 0.0
        %454 = vmatprep.subr.mxu0 0.0
        %455 = vmatpush1.msra.mxu0 0.0
        %456 = vmatprep.subr.mxu0 0.0
        %457 = vmatpush1.msra.mxu0 0.0
        %458 = vmatprep.subr.mxu0 0.0
        %459 = vmatpush1.msra.mxu0 0.0
        %460 = vmatprep.subr.mxu0 0.0
        %461 = vmatpush1.msra.mxu0 0.0
        %462 = vmatprep.subr.mxu0 0.0
        %463 = vmatpush1.msra.mxu0 0.0
        %464 = vmatprep.subr.mxu0 0.0
        %465 = vmatpush1.msra.mxu0 0.0
        %466 = vmatprep.subr.mxu0 0.0
        %467 = vmatpush1.msra.mxu0 0.0
        %468 = vmatprep.subr.mxu0 0.0
        %469 = vmatpush1.msra.mxu0 0.0
        %470 = vmatprep.subr.mxu0 0.0
        %471 = vmatpush1.msra.mxu0 0.0
        %472 = vmatprep.subr.mxu0 0.0
        %473 = vmatpush1.msra.mxu0 0.0
        %474 = vmatprep.subr.mxu0 0.0
        %475 = vmatpush1.msra.mxu0 0.0
        %476 = vmatprep.subr.mxu0 0.0
        %477 = vmatpush1.msra.mxu0 0.0
        %478 = vmatprep.subr.mxu0 0.0
        %479 = vmatpush1.msra.mxu0 0.0
        %480 = vmatprep.subr.mxu0 0.0
        %481 = vmatpush1.msra.mxu0 0.0
        %482 = vmatprep.subr.mxu0 0.0
        %483 = vmatpush1.msra.mxu0 0.0
        %484 = vmatprep.subr.mxu0 0.0
        %485 = vmatpush1.msra.mxu0 0.0
        %486 = vmatprep.subr.mxu0 0.0
        %487 = vmatpush1.msra.mxu0 0.0
        %488 = vmatprep.subr.mxu0 0.0
        %489 = vmatpush1.msra.mxu0 0.0
        %490 = vmatprep.mubr.f32.mxu0 0.0
        %491 = vmatmul.mubr.f32.gmra.mrb[0].mxu0 %v420
        %v492 = vpop.f32.mrb[0].mxu0
        %v493 = vadd.f32 0.0, %v492
        %v494 = vpop.f32.mrb[0].mxu0
        %495 = vdwg.mxu0
        %v496 = vxor.u32 %v493, 2147483648
        %v497 = vmul.f32 %v496, 1.442695
        %v498 = vpow.pop %v497
        %v499 = vadd.f32 %v498, 1.0
        %v500 = vrcp.pop %v499
        %v501 = vmul.f32 1.0, %v500
        %v502 = vtanh.pop %v493
        %v503 = vsel %vm398, %v501, %v502
        %505 = vrot.lane.b32.xlu0 %v400, 32
        %v506 = vpop.permute.xlu0 %505
        %v508 = vmul.f32 %v503, %v506
        %510 = vrot.lane.b32.xlu0 %v503, 32
        %v511 = vpop.permute.xlu0 %510
        %v513 = vmul.f32 %v503, %v511
        %515 = vrot.lane.b32.xlu0 %v513, 32
        %v516 = vpop.permute.xlu0 %515
        %v518 = vadd.f32 %v508, %v516
        %v519 = vtanh.pop %v518
        %521 = vrot.lane.b32.xlu0 %v519, 32
        %v522 = vpop.permute.xlu0 %521
        %v524 = vmul.f32 %v503, %v522
        %526 = vrot.lane.b32.xlu0 %v524, 64
        %v527 = vpop.permute.xlu0 %526
        %529 = vst.msk [vmem:[#allocation2] sm:$0xff] %vm405, %v527
        %531 = vrot.lane.b32.xlu0 %v518, 96
        %v532 = vpop.permute.xlu0 %531
        %534 = vst.msk [vmem:[#allocation3] sm:$0xff] %vm405, %v532
        %s535 = scalar_lea.vmem [#allocation2], 8
        %v536 = vld [vmem:[%s535] sm:$0xff]
        %s537 = scalar_lea.vmem [#allocation3], 8
        %v538 = vld [vmem:[%s537] sm:$0xff]
        %540 = vrot.lane.b32.xlu0 %v536, 32
        %v541 = vpop.permute.xlu0 %540
        %v543 = vsel %vm405, %v527, %v541
        %v544 = vsel %vm407, %v543, 1.0
        %s545 = scalar_lea.vmem %s2, 72
        %v546 = vld [vmem:[%s545] sm:$0xff]
        %v547 = vld [vmem:[%s545 + $0x8] sm:$0xff]
        %v548 = vld [vmem:[%s545 + $0x10] sm:$0xff]
        %v549 = vld [vmem:[%s545 + $0x18] sm:$0xff]
        %v550 = vld [vmem:[%s545 + $0x20] sm:$0xff]
        %v551 = vld [vmem:[%s545 + $0x28] sm:$0xff]
        %v552 = vld [vmem:[%s545 + $0x30] sm:$0xff]
        %v553 = vld [vmem:[%s545 + $0x38] sm:$0xff]
        %v554 = vld [vmem:[%s545 + $0x40] sm:$0x1]
        %v556 = vsel %vm418, %v544, 0
        %v559 = vsel %vm422, %v554, 0
        %561 = vmatprep.subr.mxu0 0.0
        %562 = vmatpush1.msra.mxu0 %v546
        %563 = vmatprep.subr.mxu0 0.0
        %564 = vmatpush1.msra.mxu0 %v547
        %565 = vmatprep.subr.mxu0 0.0
        %566 = vmatpush1.msra.mxu0 %v548
        %567 = vmatprep.subr.mxu0 0.0
        %568 = vmatpush1.msra.mxu0 %v549
        %569 = vmatprep.subr.mxu0 0.0
        %570 = vmatpush1.msra.mxu0 %v550
        %571 = vmatprep.subr.mxu0 0.0
        %572 = vmatpush1.msra.mxu0 %v551
        %573 = vmatprep.subr.mxu0 0.0
        %574 = vmatpush1.msra.mxu0 %v552
        %575 = vmatprep.subr.mxu0 0.0
        %576 = vmatpush1.msra.mxu0 %v553
        %577 = vmatprep.subr.mxu0 0.0
        %578 = vmatpush1.msra.mxu0 %v559
        %579 = vmatprep.subr.mxu0 0.0
        %580 = vmatpush1.msra.mxu0 0.0
        %581 = vmatprep.subr.mxu0 0.0
        %582 = vmatpush1.msra.mxu0 0.0
        %583 = vmatprep.subr.mxu0 0.0
        %584 = vmatpush1.msra.mxu0 0.0
        %585 = vmatprep.subr.mxu0 0.0
        %586 = vmatpush1.msra.mxu0 0.0
        %587 = vmatprep.subr.mxu0 0.0
        %588 = vmatpush1.msra.mxu0 0.0
        %589 = vmatprep.subr.mxu0 0.0
        %590 = vmatpush1.msra.mxu0 0.0
        %591 = vmatprep.subr.mxu0 0.0
        %592 = vmatpush1.msra.mxu0 0.0
        %593 = vmatprep.subr.mxu0 0.0
        %594 = vmatpush1.msra.mxu0 0.0
        %595 = vmatprep.subr.mxu0 0.0
        %596 = vmatpush1.msra.mxu0 0.0
        %597 = vmatprep.subr.mxu0 0.0
        %598 = vmatpush1.msra.mxu0 0.0
        %599 = vmatprep.subr.mxu0 0.0
        %600 = vmatpush1.msra.mxu0 0.0
        %601 = vmatprep.subr.mxu0 0.0
        %602 = vmatpush1.msra.mxu0 0.0
        %603 = vmatprep.subr.mxu0 0.0
        %604 = vmatpush1.msra.mxu0 0.0
        %605 = vmatprep.subr.mxu0 0.0
        %606 = vmatpush1.msra.mxu0 0.0
        %607 = vmatprep.subr.mxu0 0.0
        %608 = vmatpush1.msra.mxu0 0.0
        %609 = vmatprep.subr.mxu0 0.0
        %610 = vmatpush1.msra.mxu0 0.0
        %611 = vmatprep.subr.mxu0 0.0
        %612 = vmatpush1.msra.mxu0 0.0
        %613 = vmatprep.subr.mxu0 0.0
        %614 = vmatpush1.msra.mxu0 0.0
        %615 = vmatprep.subr.mxu0 0.0
        %616 = vmatpush1.msra.mxu0 0.0
        %617 = vmatprep.subr.mxu0 0.0
        %618 = vmatpush1.msra.mxu0 0.0
        %619 = vmatprep.subr.mxu0 0.0
        %620 = vmatpush1.msra.mxu0 0.0
        %621 = vmatprep.subr.mxu0 0.0
        %622 = vmatpush1.msra.mxu0 0.0
        %623 = vmatprep.subr.mxu0 0.0
        %624 = vmatpush1.msra.mxu0 0.0
        %625 = vmatprep.mubr.f32.mxu0 0.0
        %626 = vmatmul.mubr.f32.gmra.mrb[0].mxu0 %v556
        %v627 = vpop.f32.mrb[0].mxu0
        %v628 = vadd.f32 0.0, %v627
        %v629 = vpop.f32.mrb[0].mxu0
        %630 = vdwg.mxu0
        %v631 = vxor.u32 %v628, 2147483648
        %v632 = vmul.f32 %v631, 1.442695
        %v633 = vpow.pop %v632
        %v634 = vadd.f32 %v633, 1.0
        %v635 = vrcp.pop %v634
        %v636 = vmul.f32 1.0, %v635
        %v637 = vtanh.pop %v628
        %v638 = vsel %vm398, %v636, %v637
        %640 = vrot.lane.b32.xlu0 %v538, 32
        %v641 = vpop.permute.xlu0 %640
        %v643 = vmul.f32 %v638, %v641
        %645 = vrot.lane.b32.xlu0 %v638, 32
        %v646 = vpop.permute.xlu0 %645
        %v648 = vmul.f32 %v638, %v646
        %650 = vrot.lane.b32.xlu0 %v648, 32
        %v651 = vpop.permute.xlu0 %650
        %v653 = vadd.f32 %v643, %v651
        %v654 = vtanh.pop %v653
        %656 = vrot.lane.b32.xlu0 %v654, 32
        %v657 = vpop.permute.xlu0 %656
        %v659 = vmul.f32 %v638, %v657
        %661 = vrot.lane.b32.xlu0 %v659, 64
        %v662 = vpop.permute.xlu0 %661
        %664 = vst.msk [vmem:[%s535] sm:$0xff] %vm405, %v662
        %666 = vrot.lane.b32.xlu0 %v653, 96
        %v667 = vpop.permute.xlu0 %666
        %669 = vst.msk [vmem:[%s537] sm:$0xff] %vm405, %v667
        %v670 = vsel %vm405, %v662, 1.0
        %v671 = vld [vmem:[%s3] sm:$0xff]
        %v672 = vld [vmem:[%s3 + $0x8] sm:$0xff]
        %v673 = vld [vmem:[%s3 + $0x10] sm:$0xff]
        %v674 = vld [vmem:[%s3 + $0x18] sm:$0xff]
        %v675 = vld [vmem:[%s3 + $0x20] sm:$0x1]
        %vm676 = vcmask 269312
        %v678 = vsel %vm676, %v670, 0
        %v681 = vsel %vm422, %v675, 0
        %683 = vmatprep.subr.mxu0 0.0
        %684 = vmatpush1.msra.mxu0 %v671
        %685 = vmatprep.subr.mxu0 0.0
        %686 = vmatpush1.msra.mxu0 %v672
        %687 = vmatprep.subr.mxu0 0.0
        %688 = vmatpush1.msra.mxu0 %v673
        %689 = vmatprep.subr.mxu0 0.0
        %690 = vmatpush1.msra.mxu0 %v674
        %691 = vmatprep.subr.mxu0 0.0
        %692 = vmatpush1.msra.mxu0 %v681
        %693 = vmatprep.subr.mxu0 0.0
        %694 = vmatpush1.msra.mxu0 0.0
        %695 = vmatprep.subr.mxu0 0.0
        %696 = vmatpush1.msra.mxu0 0.0
        %697 = vmatprep.subr.mxu0 0.0
        %698 = vmatpush1.msra.mxu0 0.0
        %699 = vmatprep.subr.mxu0 0.0
        %700 = vmatpush1.msra.mxu0 0.0
        %701 = vmatprep.subr.mxu0 0.0
        %702 = vmatpush1.msra.mxu0 0.0
        %703 = vmatprep.subr.mxu0 0.0
        %704 = vmatpush1.msra.mxu0 0.0
        %705 = vmatprep.subr.mxu0 0.0
        %706 = vmatpush1.msra.mxu0 0.0
        %707 = vmatprep.subr.mxu0 0.0
        %708 = vmatpush1.msra.mxu0 0.0
        %709 = vmatprep.subr.mxu0 0.0
        %710 = vmatpush1.msra.mxu0 0.0
        %711 = vmatprep.subr.mxu0 0.0
        %712 = vmatpush1.msra.mxu0 0.0
        %713 = vmatprep.subr.mxu0 0.0
        %714 = vmatpush1.msra.mxu0 0.0
        %715 = vmatprep.subr.mxu0 0.0
        %716 = vmatpush1.msra.mxu0 0.0
        %717 = vmatprep.subr.mxu0 0.0
        %718 = vmatpush1.msra.mxu0 0.0
        %719 = vmatprep.subr.mxu0 0.0
        %720 = vmatpush1.msra.mxu0 0.0
        %721 = vmatprep.subr.mxu0 0.0
        %722 = vmatpush1.msra.mxu0 0.0
        %723 = vmatprep.subr.mxu0 0.0
        %724 = vmatpush1.msra.mxu0 0.0
        %725 = vmatprep.subr.mxu0 0.0
        %726 = vmatpush1.msra.mxu0 0.0
        %727 = vmatprep.subr.mxu0 0.0
        %728 = vmatpush1.msra.mxu0 0.0
        %729 = vmatprep.subr.mxu0 0.0
        %730 = vmatpush1.msra.mxu0 0.0
        %731 = vmatprep.subr.mxu0 0.0
        %732 = vmatpush1.msra.mxu0 0.0
        %733 = vmatprep.subr.mxu0 0.0
        %734 = vmatpush1.msra.mxu0 0.0
        %735 = vmatprep.subr.mxu0 0.0
        %736 = vmatpush1.msra.mxu0 0.0
        %737 = vmatprep.subr.mxu0 0.0
        %738 = vmatpush1.msra.mxu0 0.0
        %739 = vmatprep.subr.mxu0 0.0
        %740 = vmatpush1.msra.mxu0 0.0
        %741 = vmatprep.subr.mxu0 0.0
        %742 = vmatpush1.msra.mxu0 0.0
        %743 = vmatprep.subr.mxu0 0.0
        %744 = vmatpush1.msra.mxu0 0.0
        %745 = vmatprep.subr.mxu0 0.0
        %746 = vmatpush1.msra.mxu0 0.0
        %747 = vmatprep.mubr.f32.mxu0 0.0
        %748 = vmatmul.mubr.f32.gmra.mrb[0].mxu0 %v678
        %v749 = vpop.f32.mrb[0].mxu0
        %v750 = vadd.f32 0.0, %v749
        %v751 = vpop.f32.mrb[0].mxu0
        %752 = vdwg.mxu0
        %753 = vst [vmem:[%s288] sm:$0xff] %v750
        %p754 = scmp.eq.s32.totalorder %s24, 5
        // Predicated region
        $region49: #{tpu_custom_call.1} parent=43 // pred_check
          %p755 = pneg %p754
        $region50: #{tpu_custom_call.1} parent=43 // pred_check_branch
          %757 = sbr.rel (%p755) target = $region52
        $region51: #{tpu_custom_call.1} parent=43 // pred_region
          %v758 = vld [vmem:[#allocation2] sm:$0xff]
          %v759 = vld [vmem:[#allocation2 + $0x8] sm:$0xff]
          %760 = vst.msk [vmem:[#allocation6] sm:$0xff] %vm405, %v758
          %761 = vst.msk [vmem:[#allocation6 + $0x8] sm:$0xff] %vm405, %v759
          %v762 = vld [vmem:[#allocation3] sm:$0xff]
          %v763 = vld [vmem:[#allocation3 + $0x8] sm:$0xff]
          %764 = vst.msk [vmem:[#allocation8] sm:$0xff] %vm405, %v762
          %765 = vst.msk [vmem:[#allocation8 + $0x8] sm:$0xff] %vm405, %v763
        $region52: #{tpu_custom_call.1} parent=43 // pred_fallthru
          _
        %s766 = sand.u32 %s163, 1
        %s767 = scalar_lea.sflag [#allocation5], %s766
        %s768 = sand.u32 %s163, 1
        %s769 = smul.addr %s768, 8
        %s770 = scalar_lea.vmem [#allocation4], %s769
        // Predicated region
        $region53: #{tpu_custom_call.1} parent=43 // pred_check
          %p771 = pneg %p173
        $region54: #{tpu_custom_call.1} parent=43 // pred_check_branch
          %773 = sbr.rel (%p771) target = $region56
        $region55: #{tpu_custom_call.1} parent=43 // pred_region
          %s775 = ssub.s32 128, 128
          %776 = vsyncadd %s767, %s775
          %s777 = smul.addr %s24, 128
          %s778 = scalar_lea.hbm %s6, %s777
          %s780 = sshll.u32 %s770, 4
          %s781 = int_to_ptr.vmem [resolvable:$true] %s780
          %783 = dma.vmem_to_hbm [thread:$0]  %s781, 128, %s778, %s767
        $region56: #{tpu_custom_call.1} parent=43 // pred_fallthru
          _
        // Predicated region
        $region57: #{tpu_custom_call.1} parent=43 // pred_check
          %p784 = pneg %p194
        $region58: #{tpu_custom_call.1} parent=43 // pred_check_branch
          %786 = sbr.rel (%p784) target = $region60
        $region59: #{tpu_custom_call.1} parent=43 // pred_region
          %s788 = ssub.s32 256, 256
          %789 = vsyncadd [#allocation7], %s788
          %s790 = sshll.u32 [#allocation6], 4
          %s791 = int_to_ptr.vmem [resolvable:$true] %s790
          %796 = dma.vmem_to_hbm [thread:$0]  %s791, 256, %s7, [#allocation7], 128, 128, 8
        $region60: #{tpu_custom_call.1} parent=43 // pred_fallthru
          _
        // Predicated region
        $region61: #{tpu_custom_call.1} parent=43 // pred_check
          %p797 = pneg %p215
        $region62: #{tpu_custom_call.1} parent=43 // pred_check_branch
          %799 = sbr.rel (%p797) target = $region64
        $region63: #{tpu_custom_call.1} parent=43 // pred_region
          %s801 = ssub.s32 256, 256
          %802 = vsyncadd [#allocation7], %s801
          %s803 = sshll.u32 [#allocation8], 4
          %s804 = int_to_ptr.vmem [resolvable:$true] %s803
          %809 = dma.vmem_to_hbm [thread:$0]  %s804, 256, %s8, [#allocation7], 128, 128, 8
        $region64: #{tpu_custom_call.1} parent=43 // pred_fallthru
          _
        // Predicated region
        $region65: #{tpu_custom_call.1} parent=43 // pred_check
          %p810 = pneg %p194
        $region66: #{tpu_custom_call.1} parent=43 // pred_check_branch
          %812 = sbr.rel (%p810) target = $region68
        $region67: #{tpu_custom_call.1} parent=43 // pred_region
          %813 = dma.done [#allocation7], 256
        $region68: #{tpu_custom_call.1} parent=43 // pred_fallthru
          _
        // Predicated region
        $region69: #{tpu_custom_call.1} parent=43 // pred_check
          %p814 = pneg %p215
        $region70: #{tpu_custom_call.1} parent=43 // pred_check_branch
          %816 = sbr.rel (%p814) target = $region72
        $region71: #{tpu_custom_call.1} parent=43 // pred_region
          %817 = dma.done [#allocation7], 256
        $region72: #{tpu_custom_call.1} parent=43 // pred_fallthru
          _
      $region44: #{tpu_custom_call.1} parent=5 // pred_fallthru
        _
      %p818 = scmp.le.s32.totalorder 2, %s19
      // Predicated region
      $region73: #{tpu_custom_call.1} parent=5 // pred_check
        %p819 = pneg %p818
      $region74: #{tpu_custom_call.1} parent=5 // pred_check_branch
        %821 = sbr.rel (%p819) target = $region76
      $region75: #{tpu_custom_call.1} parent=5 // pred_region
        %s822 = ssub.s32 %s19, 2
        // Predicated region
        $region77: #{tpu_custom_call.1} parent=75 // pred_check
          %p823 = pneg %p179
        $region78: #{tpu_custom_call.1} parent=75 // pred_check_branch
          %825 = sbr.rel (%p823) target = $region80
        $region79: #{tpu_custom_call.1} parent=75 // pred_region
          %s826 = sand.u32 %s164, 1
          %s827 = scalar_lea.sflag [#allocation5], %s826
          %s828 = sand.u32 %s164, 1
          %s829 = smul.addr %s828, 8
          %s830 = scalar_lea.vmem [#allocation4], %s829
          %831 = dma.done %s827, 128
        $region80: #{tpu_custom_call.1} parent=75 // pred_fallthru
          _
      $region76: #{tpu_custom_call.1} parent=5 // pred_fallthru
        _
    $region6: #{tpu_custom_call.1} parent=1 // loop_footer
      %s23 = sadd.s32 1, %s19
    $region7: #{tpu_custom_call.1} parent=1 // loop_footer_branch
      %18 = sbr.rel target = $region3
    $region8: #{tpu_custom_call.1} parent=1 // loop_exit
      _
    %832 = vsyncpa [#allocation5], 1
    %s833 = scalar_lea.sflag [#allocation5], 1
    %834 = vsyncpa %s833, 1
    %835 = vsyncpa [#allocation7], 1

</llo_original>
